<compile_context>
chip_gen: v5e
topology: v5e:2x2
jax: 0.10.0
libtpu: 0.0.40
codegen_flags: <defaults>
</compile_context>

<pallas_src>
import jax
import jax.numpy as jnp
from jax.experimental import pallas as pl
from jax.experimental.pallas import tpu as pltpu

_LANE = 128


def _subnet_kernel(x_ref, w2t_ref, w3t_ref, w4t_ref, vec_ref, o_ref):
    """One batch tile: x_ref (1, TB) -> o_ref (1, TB); batch on the lane axis."""
    H = w2t_ref.shape[1]       # hidden_size
    H2 = w2t_ref.shape[0]      # 2 * hidden_size

    x = x_ref[...]                                    # (1, TB)

    # layer1: Linear(1,H)+BN folded -> pure VPU broadcast FMA (no K=1 matmul).
    w1c = vec_ref[0:H, 0:1]                           # (H, 1)
    b1c = vec_ref[0:H, 1:2]                           # (H, 1)
    h = w1c * x + b1c                                 # (H, TB)
    h = jnp.maximum(h, 0.1 * h)                       # LeakyReLU(0.1)

    # layer2: Linear(H, 2H)+BN folded.
    h = jnp.dot(w2t_ref[...], h, preferred_element_type=jnp.float32) \
        + vec_ref[0:H2, 2:3]
    h = jnp.maximum(h, 0.1 * h)

    # layer3: Linear(2H, 2H)+BN folded.
    h = jnp.dot(w3t_ref[...], h, preferred_element_type=jnp.float32) \
        + vec_ref[0:H2, 3:4]
    h = jnp.maximum(h, 0.1 * h)

    # layer4: Linear(2H, H)+BN folded.
    h = jnp.dot(w4t_ref[...], h, preferred_element_type=jnp.float32) \
        + vec_ref[0:H, 4:5]
    h = jnp.maximum(h, 0.1 * h)

    # output_layer: Linear(H, 1) as a sublane reduction (no N=1 matmul).
    w5c = vec_ref[0:H, 5:6]                           # (H, 1)
    b5 = vec_ref[0:1, 6:7]                            # (1, 1)
    o_ref[...] = jnp.sum(w5c * h, axis=0, keepdims=True) + b5   # (1, TB)


def fold_params(params, eps=1e-5):
    """Fold eval-mode BatchNorm into the Linear layers and pack small vectors."""
    H = params["w1"].shape[1]
    H2 = 2 * H
    scaled = {}
    for idx in range(1, 5):
        s = params[f"gamma{idx}"] / jnp.sqrt(params[f"var{idx}"] + eps)  # (1, fan_out)
        t = params[f"beta{idx}"] - params[f"mean{idx}"] * s
        scaled[f"w{idx}"] = params[f"w{idx}"] * s            # column scale
        scaled[f"b{idx}"] = params[f"b{idx}"] * s + t
    folded = {
        "w2t": scaled["w2"].T,                               # (2H, H)
        "w3t": scaled["w3"].T,                               # (2H, 2H)
        "w4t": scaled["w4"].T,                               # (H, 2H)
    }
    # Pack all per-layer vectors as columns of a single (2H, 8) slab.
    vecs = jnp.zeros((H2, 8), jnp.float32)
    vecs = vecs.at[0:H, 0].set(scaled["w1"][0])              # folded w1 row
    vecs = vecs.at[0:H, 1].set(scaled["b1"][0])
    vecs = vecs.at[0:H2, 2].set(scaled["b2"][0])
    vecs = vecs.at[0:H2, 3].set(scaled["b3"][0])
    vecs = vecs.at[0:H, 4].set(scaled["b4"][0])
    vecs = vecs.at[0:H, 5].set(params["w5"][:, 0])           # output weights
    vecs = vecs.at[0, 6].set(params["b5"][0, 0])             # output bias
    folded["vecs"] = vecs
    return folded


def _choose_tile(batch, max_tile=2048):
    """Pick the batch tile (in lanes).

    Grow the tile (up to max_tile) to amortize the ~0.35us per-grid-step
    overhead, but keep grid >= 2 whenever possible so the "parallel" grid axis
    can shard across v7x's two TensorCores (harmless on v5e/v6e).
    """
    b = pl.cdiv(batch, _LANE) * _LANE
    if b < 2 * _LANE:
        return _LANE
    half = (b // 2 // _LANE) * _LANE
    return max(_LANE, min(max_tile, half))


def subnetwork_forward_lanes(x_lanes, folded, *, max_batch_tile=2048):
    """x_lanes: (1, B) float32, batch on the lane axis. Returns (1, B)."""
    B = x_lanes.shape[1]
    TB = _choose_tile(B, max_batch_tile)
    n = pl.cdiv(B, TB)
    Bp = n * TB
    # Pad only when needed; for B a multiple of the tile this is a no-op path.
    xt = x_lanes if Bp == B else jnp.pad(x_lanes, ((0, 0), (0, Bp - B)))

    w2t, w3t, w4t, vecs = folded["w2t"], folded["w3t"], folded["w4t"], folded["vecs"]

    out = pl.pallas_call(
        _subnet_kernel,
        out_shape=jax.ShapeDtypeStruct((1, Bp), jnp.float32),
        grid=(n,),
        in_specs=[
            pl.BlockSpec((1, TB), lambda i: (0, i)),          # activations: tiled
            pl.BlockSpec(w2t.shape, lambda i: (0, 0)),        # weights: VMEM-resident
            pl.BlockSpec(w3t.shape, lambda i: (0, 0)),
            pl.BlockSpec(w4t.shape, lambda i: (0, 0)),
            pl.BlockSpec(vecs.shape, lambda i: (0, 0)),       # packed small vectors
        ],
        out_specs=pl.BlockSpec((1, TB), lambda i: (0, i)),    # lane-dense output
        compiler_params=pltpu.CompilerParams(
            dimension_semantics=("parallel",)),
    )(xt, w2t, w3t, w4t, vecs)
    return out if Bp == B else out[:, :B]


def subnetwork_forward(x, folded, *, max_batch_tile=2048):
    """x: (B, 1) float32.  folded: output of fold_params.  Returns (B, 1)."""
    B = x.shape[0]
    out = subnetwork_forward_lanes(
        x.astype(jnp.float32).reshape(1, B), folded, max_batch_tile=max_batch_tile)
    return out.reshape(B, 1)


def init_params(hidden_size=32, key=jax.random.PRNGKey(0)):
    """Deterministic synthetic parameters matching SubNetwork(hidden_size)."""
    dims = [(1, hidden_size),
            (hidden_size, hidden_size * 2),
            (hidden_size * 2, hidden_size * 2),
            (hidden_size * 2, hidden_size),
            (hidden_size, 1)]
    keys = jax.random.split(key, 32)
    params = {}
    ki = 0
    for idx, (fan_in, fan_out) in enumerate(dims, start=1):
        bound = 1.0 / (fan_in ** 0.5)
        params[f"w{idx}"] = jax.random.uniform(
            keys[ki], (fan_in, fan_out), jnp.float32, minval=-bound, maxval=bound); ki += 1
        params[f"b{idx}"] = jax.random.uniform(
            keys[ki], (1, fan_out), jnp.float32, minval=-bound, maxval=bound); ki += 1
        if idx <= 4:   # BatchNorm1d params + running stats (deterministic, non-trivial)
            params[f"gamma{idx}"] = 1.0 + 0.1 * jax.random.normal(keys[ki], (1, fan_out), jnp.float32); ki += 1
            params[f"beta{idx}"] = 0.1 * jax.random.normal(keys[ki], (1, fan_out), jnp.float32); ki += 1
            params[f"mean{idx}"] = 0.1 * jax.random.normal(keys[ki], (1, fan_out), jnp.float32); ki += 1
            params[f"var{idx}"] = 1.0 + 0.1 * jax.random.uniform(keys[ki], (1, fan_out), jnp.float32); ki += 1
    return params


def reference_forward(x, params, eps=1e-5):
    """Pure-JAX eval-mode reference (un-folded BN) for correctness checking."""
    h = x
    hp = jax.lax.Precision.HIGHEST
    for idx in range(1, 5):
        h = jnp.dot(h, params[f"w{idx}"], precision=hp) + params[f"b{idx}"]
        h = (h - params[f"mean{idx}"]) / jnp.sqrt(params[f"var{idx}"] + eps) \
            * params[f"gamma{idx}"] + params[f"beta{idx}"]
        h = jnp.where(h > 0, h, 0.1 * h)
    return jnp.dot(h, params["w5"], precision=hp) + params["b5"]


if __name__ == "__main__":
    hidden_size = 32
    batch = 512               # -> TB=256, grid=2 (both v7x TCs), pad is a no-op

    key = jax.random.PRNGKey(0)
    k_x, k_p = jax.random.split(key)

    x = jax.random.normal(k_x, (batch, 1), jnp.float32)
    params = init_params(hidden_size=hidden_size, key=k_p)
    folded = fold_params(params)

    fwd = jax.jit(subnetwork_forward)
    out = jax.block_until_ready(fwd(x, folded))

    ref = reference_forward(x, params)
    assert out.shape == (batch, 1)
    assert jnp.allclose(out, ref, atol=1e-3, rtol=1e-3), "mismatch vs reference"

    print("KERNEL_OK")
</pallas_src>

<mosaic_0001>
module attributes {stable_mosaic.version = 11 : i64} {
  func.func @_subnet_kernel(%arg0: i32, %arg1: memref<1x256xf32, #tpu.memory_space<vmem>>, %arg2: memref<64x32xf32, #tpu.memory_space<vmem>>, %arg3: memref<64x64xf32, #tpu.memory_space<vmem>>, %arg4: memref<32x64xf32, #tpu.memory_space<vmem>>, %arg5: memref<64x8xf32, #tpu.memory_space<vmem>>, %arg6: memref<1x256xf32, #tpu.memory_space<vmem>>) attributes {dimension_semantics = [#tpu.dimension_semantics<parallel>], iteration_bounds = array<i64: 2>, scalar_prefetch = 0 : i64, scratch_operands = 0 : i64, tpu.core_type = #tpu.core_type<tc>, window_params = [{transform_indices = @transform_0, window_bounds = array<i64: 1, 256>}, {pipeline_mode = #tpu.pipeline_mode<synchronous>, transform_indices = @transform_1, window_bounds = array<i64: 64, 32>}, {pipeline_mode = #tpu.pipeline_mode<synchronous>, transform_indices = @transform_2, window_bounds = array<i64: 64, 64>}, {pipeline_mode = #tpu.pipeline_mode<synchronous>, transform_indices = @transform_3, window_bounds = array<i64: 32, 64>}, {pipeline_mode = #tpu.pipeline_mode<synchronous>, transform_indices = @transform_4, window_bounds = array<i64: 64, 8>}, {transform_indices = @transform_5, window_bounds = array<i64: 1, 256>}]} {
    %c0 = arith.constant 0 : index
    %c0_0 = arith.constant 0 : index
    %0 = vector.load %arg1[%c0, %c0_0] : memref<1x256xf32, #tpu.memory_space<vmem>>, vector<1x256xf32>
    %c0_1 = arith.constant 0 : index
    %c0_2 = arith.constant 0 : index
    %1 = vector.load %arg5[%c0_1, %c0_2] : memref<64x8xf32, #tpu.memory_space<vmem>>, vector<32x1xf32>
    %c0_3 = arith.constant 0 : index
    %c1 = arith.constant 1 : index
    %2 = vector.load %arg5[%c0_3, %c1] : memref<64x8xf32, #tpu.memory_space<vmem>>, vector<32x1xf32>
    %3 = vector.broadcast %1 : vector<32x1xf32> to vector<32x256xf32>
    %4 = vector.broadcast %0 : vector<1x256xf32> to vector<32x256xf32>
    %5 = arith.mulf %3, %4 : vector<32x256xf32>
    %6 = vector.broadcast %2 : vector<32x1xf32> to vector<32x256xf32>
    %7 = arith.addf %5, %6 : vector<32x256xf32>
    %cst = arith.constant 1.000000e-01 : f32
    %8 = vector.broadcast %cst : f32 to vector<32x256xf32>
    %9 = arith.mulf %8, %7 : vector<32x256xf32>
    %10 = arith.maximumf %7, %9 : vector<32x256xf32>
    %c0_4 = arith.constant 0 : index
    %c0_5 = arith.constant 0 : index
    %11 = vector.load %arg2[%c0_4, %c0_5] : memref<64x32xf32, #tpu.memory_space<vmem>>, vector<64x32xf32>
    %cst_6 = arith.constant dense<0.000000e+00> : vector<64x256xf32>
    %12 = tpu.matmul %11, %10, %cst_6 {dimension_numbers = #tpu.dot_dimension_numbers<[1], [0], [0], [1], [0, 0, 1, 1], [], []>} : vector<64x32xf32>, vector<32x256xf32>, vector<64x256xf32> -> vector<64x256xf32>
    %c0_7 = arith.constant 0 : index
    %c2 = arith.constant 2 : index
    %13 = vector.load %arg5[%c0_7, %c2] : memref<64x8xf32, #tpu.memory_space<vmem>>, vector<64x1xf32>
    %14 = vector.broadcast %13 : vector<64x1xf32> to vector<64x256xf32>
    %15 = arith.addf %12, %14 : vector<64x256xf32>
    %cst_8 = arith.constant 1.000000e-01 : f32
    %16 = vector.broadcast %cst_8 : f32 to vector<64x256xf32>
    %17 = arith.mulf %16, %15 : vector<64x256xf32>
    %18 = arith.maximumf %15, %17 : vector<64x256xf32>
    %c0_9 = arith.constant 0 : index
    %c0_10 = arith.constant 0 : index
    %19 = vector.load %arg3[%c0_9, %c0_10] : memref<64x64xf32, #tpu.memory_space<vmem>>, vector<64x64xf32>
    %cst_11 = arith.constant dense<0.000000e+00> : vector<64x256xf32>
    %20 = tpu.matmul %19, %18, %cst_11 {dimension_numbers = #tpu.dot_dimension_numbers<[1], [0], [0], [1], [0, 0, 1, 1], [], []>} : vector<64x64xf32>, vector<64x256xf32>, vector<64x256xf32> -> vector<64x256xf32>
    %c0_12 = arith.constant 0 : index
    %c3 = arith.constant 3 : index
    %21 = vector.load %arg5[%c0_12, %c3] : memref<64x8xf32, #tpu.memory_space<vmem>>, vector<64x1xf32>
    %22 = vector.broadcast %21 : vector<64x1xf32> to vector<64x256xf32>
    %23 = arith.addf %20, %22 : vector<64x256xf32>
    %cst_13 = arith.constant 1.000000e-01 : f32
    %24 = vector.broadcast %cst_13 : f32 to vector<64x256xf32>
    %25 = arith.mulf %24, %23 : vector<64x256xf32>
    %26 = arith.maximumf %23, %25 : vector<64x256xf32>
    %c0_14 = arith.constant 0 : index
    %c0_15 = arith.constant 0 : index
    %27 = vector.load %arg4[%c0_14, %c0_15] : memref<32x64xf32, #tpu.memory_space<vmem>>, vector<32x64xf32>
    %cst_16 = arith.constant dense<0.000000e+00> : vector<32x256xf32>
    %28 = tpu.matmul %27, %26, %cst_16 {dimension_numbers = #tpu.dot_dimension_numbers<[1], [0], [0], [1], [0, 0, 1, 1], [], []>} : vector<32x64xf32>, vector<64x256xf32>, vector<32x256xf32> -> vector<32x256xf32>
    %c0_17 = arith.constant 0 : index
    %c4 = arith.constant 4 : index
    %29 = vector.load %arg5[%c0_17, %c4] : memref<64x8xf32, #tpu.memory_space<vmem>>, vector<32x1xf32>
    %30 = vector.broadcast %29 : vector<32x1xf32> to vector<32x256xf32>
    %31 = arith.addf %28, %30 : vector<32x256xf32>
    %cst_18 = arith.constant 1.000000e-01 : f32
    %32 = vector.broadcast %cst_18 : f32 to vector<32x256xf32>
    %33 = arith.mulf %32, %31 : vector<32x256xf32>
    %34 = arith.maximumf %31, %33 : vector<32x256xf32>
    %c0_19 = arith.constant 0 : index
    %c5 = arith.constant 5 : index
    %35 = vector.load %arg5[%c0_19, %c5] : memref<64x8xf32, #tpu.memory_space<vmem>>, vector<32x1xf32>
    %c0_20 = arith.constant 0 : index
    %c6 = arith.constant 6 : index
    %36 = vector.load %arg5[%c0_20, %c6] : memref<64x8xf32, #tpu.memory_space<vmem>>, vector<1x1xf32>
    %37 = vector.broadcast %35 : vector<32x1xf32> to vector<32x256xf32>
    %38 = arith.mulf %37, %34 : vector<32x256xf32>
    %cst_21 = arith.constant dense<0.000000e+00> : vector<256xf32>
    %39 = vector.multi_reduction <add>, %38, %cst_21 [0] : vector<32x256xf32> to vector<256xf32>
    %40 = vector.shape_cast %39 : vector<256xf32> to vector<1x256xf32>
    %41 = vector.broadcast %36 : vector<1x1xf32> to vector<1x256xf32>
    %42 = arith.addf %40, %41 : vector<1x256xf32>
    %c0_22 = arith.constant 0 : index
    %c0_23 = arith.constant 0 : index
    %43 = vector.load %arg6[%c0_22, %c0_23] : memref<1x256xf32, #tpu.memory_space<vmem>>, vector<1x256xf32>
    tpu.vector_store %arg6[%c0_22, %c0_23], %42 {strides = array<i32>} : memref<1x256xf32, #tpu.memory_space<vmem>>, vector<1x256xf32>,
    return
  }
  func.func @transform_0(%arg0: i32) -> (i32, i32) {
    %c0_i32 = arith.constant 0 : i32
    %c0_i32_0 = arith.constant 0 : i32
    return %c0_i32, %arg0 : i32, i32
  }
  func.func @transform_1(%arg0: i32) -> (i32, i32) {
    %c0_i32 = arith.constant 0 : i32
    %c0_i32_0 = arith.constant 0 : i32
    %c0_i32_1 = arith.constant 0 : i32
    return %c0_i32, %c0_i32_0 : i32, i32
  }
  func.func @transform_2(%arg0: i32) -> (i32, i32) {
    %c0_i32 = arith.constant 0 : i32
    %c0_i32_0 = arith.constant 0 : i32
    %c0_i32_1 = arith.constant 0 : i32
    return %c0_i32, %c0_i32_0 : i32, i32
  }
  func.func @transform_3(%arg0: i32) -> (i32, i32) {
    %c0_i32 = arith.constant 0 : i32
    %c0_i32_0 = arith.constant 0 : i32
    %c0_i32_1 = arith.constant 0 : i32
    return %c0_i32, %c0_i32_0 : i32, i32
  }
  func.func @transform_4(%arg0: i32) -> (i32, i32) {
    %c0_i32 = arith.constant 0 : i32
    %c0_i32_0 = arith.constant 0 : i32
    %c0_i32_1 = arith.constant 0 : i32
    return %c0_i32, %c0_i32_0 : i32, i32
  }
  func.func @transform_5(%arg0: i32) -> (i32, i32) {
    %c0_i32 = arith.constant 0 : i32
    %c0_i32_0 = arith.constant 0 : i32
    return %c0_i32, %arg0 : i32, i32
  }
}

</mosaic_0001>

<llo_original>
// kernel: subnetwork_forward.1
$region0: #{subnetwork_forward.1}
  #allocation0 [shape = 'u32[]', space=smem, size = 0x4, offset = 0x4, fixed_abs, tag = 'smem constant byte address 0x4 - core index']
  #allocation1 [shape = 'u32[72,128]{1,0:T(1,128)}', space=vmem, size = 0x9000, scoped, tag = 'internal scratch']
  %s0 = inlined_call_operand.vmem [shape: f32[1,512], index: 0, kind: input, shape index: {}]
  %s1 = inlined_call_operand.vmem [shape: f32[64,32], index: 1, kind: input, shape index: {}]
  %s2 = inlined_call_operand.vmem [shape: f32[64,64], index: 2, kind: input, shape index: {}]
  %s3 = inlined_call_operand.vmem [shape: f32[32,64], index: 3, kind: input, shape index: {}]
  %s4 = inlined_call_operand.vmem [shape: f32[64,8], index: 4, kind: input, shape index: {}]
  %s5 = inlined_call_operand.hbm [shape: f32[1,512], index: 5, kind: output, shape index: {}]
  %s6 = sld [smem:[#allocation0]]
  $region53: #{subnetwork_forward.1} parent=0
    _
  %s8 = ssub.s32 1, %s6
  %s9 = scalar_select 0, %s8, %s6
  $region1: #{subnetwork_forward.1} parent=0
    #allocation2 [shape = 'u8[2048]{0}', space=vmem, size = 0x800, scoped, tag = 'output window, operand 0']
    #allocation3 [shape = 's32[2]{0}', space=sflag, size = 0x8, scoped, tag = 'scoped memory for subnetwork_forward.1']
    %10 = vsyncpa [#allocation3], 0
    %s11 = scalar_lea.sflag [#allocation3], 1
    %12 = vsyncpa %s11, 0
    loop: start=0, step=1, limit=4
    $region2: #{subnetwork_forward.1} parent=1 // loop_pre_header
      _
    $region3: #{subnetwork_forward.1} parent=1 // loop_header
      %s14 = sphi 0, %s18
      %p15 = scmp.ge.s32.totalorder %s14, 4
      %s24 = sphi 0, %s26
      %s27 = sphi 0, %s24
      %s28 = sphi 0, %s27
      %s44 = sphi 0, %s28
      %s48 = sphi 0, %s48
      %s50 = sphi 0, %s48
      %s51 = sphi 0, %s50
      %s65 = sphi 0, %s51
      %s69 = sphi 0, %s69
      %s71 = sphi 0, %s69
      %s72 = sphi 0, %s71
      %s86 = sphi 0, %s72
      %s90 = sphi 0, %s90
      %s92 = sphi 0, %s90
      %s93 = sphi 0, %s92
      %s107 = sphi 0, %s93
      %s111 = sphi 0, %s111
      %s113 = sphi 0, %s111
      %s114 = sphi 0, %s113
      %s128 = sphi 0, %s114
      %s134 = sphi 0, %s136
      %s137 = sphi 0, %s134
      %s138 = sphi 0, %s137
      %s154 = sphi 0, %s138
    $region4: #{subnetwork_forward.1} parent=1 // loop_header_branch
      %17 = sbr.rel (%p15) target = $region8
    $region5: #{subnetwork_forward.1} parent=1 // loop_body
      %s19 = ssub.s32 %s14, 1
      %s20 = ssub.s32 %s14, 2
      %s21 = sadd.s32 %s14, 1
      %s22 = ssub.s32 %s14, %s21
      %p23 = scmp.eq.s32.totalorder %s22, 0
      %s25 = sadd.s32 %s24, 1
      %s26 = scalar_select %p23, %s24, %s25
      %p29 = pneg %p23
      %p30 = scmp.eq.s32.totalorder %s14, 1
      %p31 = por %p29, %p30
      %p32 = scmp.ne.s32.totalorder %s24, %s27
      %p33 = scmp.eq.s32.totalorder %s14, 0
      %p34 = por %p32, %p33
      %p35 = scmp.ne.s32.totalorder %s24, %s27
      %p36 = scmp.eq.s32.totalorder %s19, 1
      %p37 = por %p35, %p36
      %p38 = scmp.ne.s32.totalorder %s27, %s28
      %p39 = scmp.eq.s32.totalorder %s19, 0
      %p40 = por %p38, %p39
      %p41 = scmp.ne.s32.totalorder %s27, %s28
      %p42 = scmp.eq.s32.totalorder %s20, 1
      %p43 = por %p41, %p42
      %p45 = scmp.ne.s32.totalorder %s28, %s44
      %p46 = scmp.eq.s32.totalorder %s20, 0
      %p47 = por %p45, %p46
      %s49 = sadd.s32 %s48, 1
      %p52 = scmp.eq.s32.totalorder %s14, 1
      %p53 = scmp.ne.s32.totalorder %s48, %s50
      %p54 = scmp.eq.s32.totalorder %s14, 0
      %p55 = por %p53, %p54
      %p56 = scmp.ne.s32.totalorder %s48, %s50
      %p57 = scmp.eq.s32.totalorder %s19, 1
      %p58 = por %p56, %p57
      %p59 = scmp.ne.s32.totalorder %s50, %s51
      %p60 = scmp.eq.s32.totalorder %s19, 0
      %p61 = por %p59, %p60
      %p62 = scmp.ne.s32.totalorder %s50, %s51
      %p63 = scmp.eq.s32.totalorder %s20, 1
      %p64 = por %p62, %p63
      %p66 = scmp.ne.s32.totalorder %s51, %s65
      %p67 = scmp.eq.s32.totalorder %s20, 0
      %p68 = por %p66, %p67
      %s70 = sadd.s32 %s69, 1
      %p73 = scmp.eq.s32.totalorder %s14, 1
      %p74 = scmp.ne.s32.totalorder %s69, %s71
      %p75 = scmp.eq.s32.totalorder %s14, 0
      %p76 = por %p74, %p75
      %p77 = scmp.ne.s32.totalorder %s69, %s71
      %p78 = scmp.eq.s32.totalorder %s19, 1
      %p79 = por %p77, %p78
      %p80 = scmp.ne.s32.totalorder %s71, %s72
      %p81 = scmp.eq.s32.totalorder %s19, 0
      %p82 = por %p80, %p81
      %p83 = scmp.ne.s32.totalorder %s71, %s72
      %p84 = scmp.eq.s32.totalorder %s20, 1
      %p85 = por %p83, %p84
      %p87 = scmp.ne.s32.totalorder %s72, %s86
      %p88 = scmp.eq.s32.totalorder %s20, 0
      %p89 = por %p87, %p88
      %s91 = sadd.s32 %s90, 1
      %p94 = scmp.eq.s32.totalorder %s14, 1
      %p95 = scmp.ne.s32.totalorder %s90, %s92
      %p96 = scmp.eq.s32.totalorder %s14, 0
      %p97 = por %p95, %p96
      %p98 = scmp.ne.s32.totalorder %s90, %s92
      %p99 = scmp.eq.s32.totalorder %s19, 1
      %p100 = por %p98, %p99
      %p101 = scmp.ne.s32.totalorder %s92, %s93
      %p102 = scmp.eq.s32.totalorder %s19, 0
      %p103 = por %p101, %p102
      %p104 = scmp.ne.s32.totalorder %s92, %s93
      %p105 = scmp.eq.s32.totalorder %s20, 1
      %p106 = por %p104, %p105
      %p108 = scmp.ne.s32.totalorder %s93, %s107
      %p109 = scmp.eq.s32.totalorder %s20, 0
      %p110 = por %p108, %p109
      %s112 = sadd.s32 %s111, 1
      %p115 = scmp.eq.s32.totalorder %s14, 1
      %p116 = scmp.ne.s32.totalorder %s111, %s113
      %p117 = scmp.eq.s32.totalorder %s14, 0
      %p118 = por %p116, %p117
      %p119 = scmp.ne.s32.totalorder %s111, %s113
      %p120 = scmp.eq.s32.totalorder %s19, 1
      %p121 = por %p119, %p120
      %p122 = scmp.ne.s32.totalorder %s113, %s114
      %p123 = scmp.eq.s32.totalorder %s19, 0
      %p124 = por %p122, %p123
      %p125 = scmp.ne.s32.totalorder %s113, %s114
      %p126 = scmp.eq.s32.totalorder %s20, 1
      %p127 = por %p125, %p126
      %p129 = scmp.ne.s32.totalorder %s114, %s128
      %p130 = scmp.eq.s32.totalorder %s20, 0
      %p131 = por %p129, %p130
      %s132 = ssub.s32 %s14, %s21
      %p133 = scmp.eq.s32.totalorder %s132, 0
      %s135 = sadd.s32 %s134, 1
      %s136 = scalar_select %p133, %s134, %s135
      %p139 = pneg %p133
      %p140 = scmp.eq.s32.totalorder %s14, 1
      %p141 = por %p139, %p140
      %p142 = scmp.ne.s32.totalorder %s134, %s137
      %p143 = scmp.eq.s32.totalorder %s14, 0
      %p144 = por %p142, %p143
      %p145 = scmp.ne.s32.totalorder %s134, %s137
      %p146 = scmp.eq.s32.totalorder %s19, 1
      %p147 = por %p145, %p146
      %p148 = scmp.ne.s32.totalorder %s137, %s138
      %p149 = scmp.eq.s32.totalorder %s19, 0
      %p150 = por %p148, %p149
      %p151 = scmp.ne.s32.totalorder %s137, %s138
      %p152 = scmp.eq.s32.totalorder %s20, 1
      %p153 = por %p151, %p152
      %p155 = scmp.ne.s32.totalorder %s138, %s154
      %p156 = scmp.eq.s32.totalorder %s20, 0
      %p157 = por %p155, %p156
      %p158 = scmp.le.s32.totalorder 1, %s14
      %p159 = scmp.lt.s32.totalorder %s14, 3
      %p160 = pnand %p158, %p159
      %p161 = pneg %p160
      // Predicated region
      $region9: #{subnetwork_forward.1} parent=5 // pred_check
        _
      $region10: #{subnetwork_forward.1} parent=5 // pred_check_branch
        %163 = sbr.rel (%p160) target = $region12
      $region11: #{subnetwork_forward.1} parent=5 // pred_region
        %s164 = ssub.s32 %s14, 1
        // Predicated region
        $region13: #{subnetwork_forward.1} parent=11 // pred_check
          %p165 = pneg %p61
        $region14: #{subnetwork_forward.1} parent=11 // pred_check_branch
          %167 = sbr.rel (%p165) target = $region16
        $region15: #{subnetwork_forward.1} parent=11 // pred_region
          _
        $region16: #{subnetwork_forward.1} parent=11 // pred_fallthru
          _
        // Predicated region
        $region17: #{subnetwork_forward.1} parent=11 // pred_check
          %p168 = pneg %p82
        $region18: #{subnetwork_forward.1} parent=11 // pred_check_branch
          %170 = sbr.rel (%p168) target = $region20
        $region19: #{subnetwork_forward.1} parent=11 // pred_region
          _
        $region20: #{subnetwork_forward.1} parent=11 // pred_fallthru
          _
        // Predicated region
        $region21: #{subnetwork_forward.1} parent=11 // pred_check
          %p171 = pneg %p103
        $region22: #{subnetwork_forward.1} parent=11 // pred_check_branch
          %173 = sbr.rel (%p171) target = $region24
        $region23: #{subnetwork_forward.1} parent=11 // pred_region
          _
        $region24: #{subnetwork_forward.1} parent=11 // pred_fallthru
          _
        // Predicated region
        $region25: #{subnetwork_forward.1} parent=11 // pred_check
          %p174 = pneg %p124
        $region26: #{subnetwork_forward.1} parent=11 // pred_check_branch
          %176 = sbr.rel (%p174) target = $region28
        $region27: #{subnetwork_forward.1} parent=11 // pred_region
          _
        $region28: #{subnetwork_forward.1} parent=11 // pred_fallthru
          _
      $region12: #{subnetwork_forward.1} parent=5 // pred_fallthru
        _
      %p177 = scmp.lt.s32.totalorder %s14, 2
      // Predicated region
      $region29: #{subnetwork_forward.1} parent=5 // pred_check
        %p178 = pneg %p177
      $region30: #{subnetwork_forward.1} parent=5 // pred_check_branch
        %180 = sbr.rel (%p178) target = $region32
      $region31: #{subnetwork_forward.1} parent=5 // pred_region
        // Predicated region
        $region33: #{subnetwork_forward.1} parent=31 // pred_check
          %p181 = pneg %p34
        $region34: #{subnetwork_forward.1} parent=31 // pred_check_branch
          %183 = sbr.rel (%p181) target = $region36
        $region35: #{subnetwork_forward.1} parent=31 // pred_region
          %s184 = smul.u32 2, %s14
          %p185 = scmp.lt.s32.totalorder %s184, 3
          %s186 = scalar_select %p185, %s184, 3
          %s187 = scalar_lea.vmem %s0, %s186
          %s188 = smul.u32 2, %s14
        $region36: #{subnetwork_forward.1} parent=31 // pred_fallthru
          _
      $region32: #{subnetwork_forward.1} parent=5 // pred_fallthru
        _
      %p189 = scmp.le.s32.totalorder 1, %s14
      %p190 = scmp.lt.s32.totalorder %s14, 3
      %p191 = pnand %p189, %p190
      %p192 = pneg %p191
      // Predicated region
      $region37: #{subnetwork_forward.1} parent=5 // pred_check
        _
      $region38: #{subnetwork_forward.1} parent=5 // pred_check_branch
        %194 = sbr.rel (%p191) target = $region40
      $region39: #{subnetwork_forward.1} parent=5 // pred_region
        %s195 = ssub.s32 %s14, 1
        %s196 = smul.u32 2, %s19
        %p197 = scmp.lt.s32.totalorder %s196, 3
        %s198 = scalar_select %p197, %s196, 3
        %s199 = scalar_lea.vmem %s0, %s198
        %p200 = pneg %p40
        %p201 = pneg %p37
        %p202 = pneg %p61
        %p203 = pneg %p58
        %p204 = pneg %p82
        %p205 = pneg %p79
        %p206 = pneg %p103
        %p207 = pneg %p100
        %p208 = pneg %p124
        %p209 = pneg %p121
        %p210 = pneg %p150
        %p211 = pneg %p147
        %s212 = sand.u32 %s137, 1
        %s213 = scalar_lea.sflag [#allocation3], %s212
        %s214 = sand.u32 %s137, 1
        %s215 = smul.addr %s214, 2
        %s216 = scalar_lea.vmem [#allocation2], %s215
        %s217 = smul.u32 2, %s19
        %p218 = scmp.lt.s32.totalorder %s217, 3
        %s219 = scalar_select %p218, %s217, 3
        %s220 = scalar_lea.vmem %s0, %s219
        %s221 = smul.u32 2, %s19
        %s222 = smul.u32 2, %s19
        %v223 = vld [vmem:[%s220] sm:$0x3]
        %v224 = vld [vmem:[%s4] sm:$0xff]
        %v225 = vld [vmem:[%s4 + $0x8] sm:$0xff]
        %v226 = vld [vmem:[%s4 + $0x10] sm:$0xff]
        %v227 = vld [vmem:[%s4 + $0x18] sm:$0xff]
        %229 = vset.pattern.permute.xlu0 0
        %230 = vperm.xlu0 %229, %v224
        %v231 = vpop.permute.xlu0 %230
        %234 = vset.pattern.permute.xlu0 0
        %235 = vperm.xlu0 %234, %v225
        %v236 = vpop.permute.xlu0 %235
        %239 = vset.pattern.permute.xlu0 0
        %240 = vperm.xlu0 %239, %v226
        %v241 = vpop.permute.xlu0 %240
        %244 = vset.pattern.permute.xlu0 0
        %245 = vperm.xlu0 %244, %v227
        %v246 = vpop.permute.xlu0 %245
        %v249 = vperm.slane %v223, 0
        %v250 = vperm.slane %v223, 1
        %v253 = vmul.f32 %v231, %v249
        %v254 = vmul.f32 %v231, %v250
        %v255 = vmul.f32 %v236, %v249
        %v256 = vmul.f32 %v236, %v250
        %v257 = vmul.f32 %v241, %v249
        %v258 = vmul.f32 %v241, %v250
        %v259 = vmul.f32 %v246, %v249
        %v260 = vmul.f32 %v246, %v250
        %261 = vset.pattern.permute.xlu0 1
        %262 = vperm.xlu0 %261, %v224
        %v263 = vpop.permute.xlu0 %262
        %265 = vset.pattern.permute.xlu0 1
        %266 = vperm.xlu0 %265, %v225
        %v267 = vpop.permute.xlu0 %266
        %269 = vset.pattern.permute.xlu0 1
        %270 = vperm.xlu0 %269, %v226
        %v271 = vpop.permute.xlu0 %270
        %273 = vset.pattern.permute.xlu0 1
        %274 = vperm.xlu0 %273, %v227
        %v275 = vpop.permute.xlu0 %274
        %v277 = vadd.f32 %v253, %v263
        %v278 = vadd.f32 %v254, %v263
        %v279 = vadd.f32 %v255, %v267
        %v280 = vadd.f32 %v256, %v267
        %v281 = vadd.f32 %v257, %v271
        %v282 = vadd.f32 %v258, %v271
        %v283 = vadd.f32 %v259, %v275
        %v284 = vadd.f32 %v260, %v275
        %v285 = vmul.f32 %v277, 0.1
        %v286 = vmul.f32 %v278, 0.1
        %v287 = vmul.f32 %v279, 0.1
        %v288 = vmul.f32 %v280, 0.1
        %v289 = vmul.f32 %v281, 0.1
        %v290 = vmul.f32 %v282, 0.1
        %v291 = vmul.f32 %v283, 0.1
        %v292 = vmul.f32 %v284, 0.1
        %v293 = vmax.f32 %v277, %v285
        %v294 = vmax.f32 %v278, %v286
        %v295 = vmax.f32 %v279, %v287
        %v296 = vmax.f32 %v280, %v288
        %v297 = vmax.f32 %v281, %v289
        %v298 = vmax.f32 %v282, %v290
        %v299 = vmax.f32 %v283, %v291
        %v300 = vmax.f32 %v284, %v292
        %v301 = vld [vmem:[%s1] sm:$0xff]
        %v302 = vld [vmem:[%s1 + $0x8] sm:$0xff]
        %v303 = vld [vmem:[%s1 + $0x10] sm:$0xff]
        %v304 = vld [vmem:[%s1 + $0x18] sm:$0xff]
        %v305 = vld [vmem:[%s1 + $0x20] sm:$0xff]
        %v306 = vld [vmem:[%s1 + $0x28] sm:$0xff]
        %v307 = vld [vmem:[%s1 + $0x30] sm:$0xff]
        %v308 = vld [vmem:[%s1 + $0x38] sm:$0xff]
        %v309 = vld [vmem:[%s4] sm:$0xff]
        %v310 = vld [vmem:[%s4 + $0x8] sm:$0xff]
        %v311 = vld [vmem:[%s4 + $0x10] sm:$0xff]
        %v312 = vld [vmem:[%s4 + $0x18] sm:$0xff]
        %v313 = vld [vmem:[%s4 + $0x20] sm:$0xff]
        %v314 = vld [vmem:[%s4 + $0x28] sm:$0xff]
        %v315 = vld [vmem:[%s4 + $0x30] sm:$0xff]
        %v316 = vld [vmem:[%s4 + $0x38] sm:$0xff]
        %318 = vset.pattern.permute.xlu0 2
        %319 = vperm.xlu0 %318, %v309
        %v320 = vpop.permute.xlu0 %319
        %323 = vset.pattern.permute.xlu0 2
        %324 = vperm.xlu0 %323, %v310
        %v325 = vpop.permute.xlu0 %324
        %328 = vset.pattern.permute.xlu0 2
        %329 = vperm.xlu0 %328, %v311
        %v330 = vpop.permute.xlu0 %329
        %333 = vset.pattern.permute.xlu0 2
        %334 = vperm.xlu0 %333, %v312
        %v335 = vpop.permute.xlu0 %334
        %338 = vset.pattern.permute.xlu0 2
        %339 = vperm.xlu0 %338, %v313
        %v340 = vpop.permute.xlu0 %339
        %343 = vset.pattern.permute.xlu0 2
        %344 = vperm.xlu0 %343, %v314
        %v345 = vpop.permute.xlu0 %344
        %348 = vset.pattern.permute.xlu0 2
        %349 = vperm.xlu0 %348, %v315
        %v350 = vpop.permute.xlu0 %349
        %353 = vset.pattern.permute.xlu0 2
        %354 = vperm.xlu0 %353, %v316
        %v355 = vpop.permute.xlu0 %354
        %vm357 = vcmask 261120
        %v359 = vsel %vm357, %v301, 0
        %v362 = vsel %vm357, %v302, 0
        %v365 = vsel %vm357, %v303, 0
        %v368 = vsel %vm357, %v304, 0
        %v371 = vsel %vm357, %v305, 0
        %v374 = vsel %vm357, %v306, 0
        %v377 = vsel %vm357, %v307, 0
        %v380 = vsel %vm357, %v308, 0
        %382 = vmatpush.msra.mxu0 0.0
        %383 = vmatpush.msra.mxu0 0.0
        %384 = vmatpush.msra.mxu0 0.0
        %385 = vmatpush.msra.mxu0 0.0
        %386 = vmatpush.msra.mxu0 0.0
        %387 = vmatpush.msra.mxu0 0.0
        %388 = vmatpush.msra.mxu0 0.0
        %389 = vmatpush.msra.mxu0 0.0
        %390 = vmatpush.msra.mxu0 0.0
        %391 = vmatpush.msra.mxu0 0.0
        %392 = vmatpush.msra.mxu0 0.0
        %393 = vmatpush.msra.mxu0 0.0
        %394 = vmatpush.msra.mxu0 %v299
        %395 = vmatpush.msra.mxu0 %v297
        %396 = vmatpush.msra.mxu0 %v295
        %397 = vmatpush.msra.mxu0 %v293
        %398 = vmatmul.f32.gmra.mxu0 %v359
        %v399 = vpop.f32.mrf.mxu0
        %v400 = vadd.f32 %v320, %v399
        %401 = vmatmul.f32.gmra.mxu0 %v362
        %v402 = vpop.f32.mrf.mxu0
        %v403 = vadd.f32 %v325, %v402
        %404 = vmatmul.f32.gmra.mxu0 %v365
        %v405 = vpop.f32.mrf.mxu0
        %v406 = vadd.f32 %v330, %v405
        %407 = vmatmul.f32.gmra.mxu0 %v368
        %v408 = vpop.f32.mrf.mxu0
        %v409 = vadd.f32 %v335, %v408
        %410 = vmatmul.f32.gmra.mxu0 %v371
        %v411 = vpop.f32.mrf.mxu0
        %v412 = vadd.f32 %v340, %v411
        %413 = vmatmul.f32.gmra.mxu0 %v374
        %v414 = vpop.f32.mrf.mxu0
        %v415 = vadd.f32 %v345, %v414
        %416 = vmatmul.f32.gmra.mxu0 %v377
        %v417 = vpop.f32.mrf.mxu0
        %v418 = vadd.f32 %v350, %v417
        %419 = vmatmul.f32.gmra.mxu0 %v380
        %v420 = vpop.f32.mrf.mxu0
        %v421 = vadd.f32 %v355, %v420
        %422 = vdwg.mxu0
        %423 = vmatpush.msra.mxu0 0.0
        %424 = vmatpush.msra.mxu0 0.0
        %425 = vmatpush.msra.mxu0 0.0
        %426 = vmatpush.msra.mxu0 0.0
        %427 = vmatpush.msra.mxu0 0.0
        %428 = vmatpush.msra.mxu0 0.0
        %429 = vmatpush.msra.mxu0 0.0
        %430 = vmatpush.msra.mxu0 0.0
        %431 = vmatpush.msra.mxu0 0.0
        %432 = vmatpush.msra.mxu0 0.0
        %433 = vmatpush.msra.mxu0 0.0
        %434 = vmatpush.msra.mxu0 0.0
        %435 = vmatpush.msra.mxu0 %v300
        %436 = vmatpush.msra.mxu0 %v298
        %437 = vmatpush.msra.mxu0 %v296
        %438 = vmatpush.msra.mxu0 %v294
        %439 = vmatmul.f32.gmra.mxu0 %v359
        %v440 = vpop.f32.mrf.mxu0
        %v441 = vadd.f32 %v320, %v440
        %442 = vmatmul.f32.gmra.mxu0 %v362
        %v443 = vpop.f32.mrf.mxu0
        %v444 = vadd.f32 %v325, %v443
        %445 = vmatmul.f32.gmra.mxu0 %v365
        %v446 = vpop.f32.mrf.mxu0
        %v447 = vadd.f32 %v330, %v446
        %448 = vmatmul.f32.gmra.mxu0 %v368
        %v449 = vpop.f32.mrf.mxu0
        %v450 = vadd.f32 %v335, %v449
        %451 = vmatmul.f32.gmra.mxu0 %v371
        %v452 = vpop.f32.mrf.mxu0
        %v453 = vadd.f32 %v340, %v452
        %454 = vmatmul.f32.gmra.mxu0 %v374
        %v455 = vpop.f32.mrf.mxu0
        %v456 = vadd.f32 %v345, %v455
        %457 = vmatmul.f32.gmra.mxu0 %v377
        %v458 = vpop.f32.mrf.mxu0
        %v459 = vadd.f32 %v350, %v458
        %460 = vmatmul.f32.gmra.mxu0 %v380
        %v461 = vpop.f32.mrf.mxu0
        %v462 = vadd.f32 %v355, %v461
        %463 = vdwg.mxu0
        %v464 = vmul.f32 %v400, 0.1
        %v465 = vmul.f32 %v441, 0.1
        %v466 = vmul.f32 %v403, 0.1
        %v467 = vmul.f32 %v444, 0.1
        %v468 = vmul.f32 %v406, 0.1
        %v469 = vmul.f32 %v447, 0.1
        %v470 = vmul.f32 %v409, 0.1
        %v471 = vmul.f32 %v450, 0.1
        %v472 = vmul.f32 %v412, 0.1
        %v473 = vmul.f32 %v453, 0.1
        %v474 = vmul.f32 %v415, 0.1
        %v475 = vmul.f32 %v456, 0.1
        %v476 = vmul.f32 %v418, 0.1
        %v477 = vmul.f32 %v459, 0.1
        %v478 = vmul.f32 %v421, 0.1
        %v479 = vmul.f32 %v462, 0.1
        %v480 = vmax.f32 %v400, %v464
        %v481 = vmax.f32 %v441, %v465
        %v482 = vmax.f32 %v403, %v466
        %v483 = vmax.f32 %v444, %v467
        %v484 = vmax.f32 %v406, %v468
        %v485 = vmax.f32 %v447, %v469
        %v486 = vmax.f32 %v409, %v470
        %v487 = vmax.f32 %v450, %v471
        %v488 = vmax.f32 %v412, %v472
        %v489 = vmax.f32 %v453, %v473
        %v490 = vmax.f32 %v415, %v474
        %v491 = vmax.f32 %v456, %v475
        %v492 = vmax.f32 %v418, %v476
        %v493 = vmax.f32 %v459, %v477
        %v494 = vmax.f32 %v421, %v478
        %v495 = vmax.f32 %v462, %v479
        %v496 = vld [vmem:[%s2] sm:$0xff]
        %v497 = vld [vmem:[%s2 + $0x8] sm:$0xff]
        %v498 = vld [vmem:[%s2 + $0x10] sm:$0xff]
        %v499 = vld [vmem:[%s2 + $0x18] sm:$0xff]
        %v500 = vld [vmem:[%s2 + $0x20] sm:$0xff]
        %v501 = vld [vmem:[%s2 + $0x28] sm:$0xff]
        %v502 = vld [vmem:[%s2 + $0x30] sm:$0xff]
        %v503 = vld [vmem:[%s2 + $0x38] sm:$0xff]
        %504 = vset.pattern.permute.xlu0 3
        %505 = vperm.xlu0 %504, %v309
        %v506 = vpop.permute.xlu0 %505
        %508 = vset.pattern.permute.xlu0 3
        %509 = vperm.xlu0 %508, %v310
        %v510 = vpop.permute.xlu0 %509
        %512 = vset.pattern.permute.xlu0 3
        %513 = vperm.xlu0 %512, %v311
        %v514 = vpop.permute.xlu0 %513
        %516 = vset.pattern.permute.xlu0 3
        %517 = vperm.xlu0 %516, %v312
        %v518 = vpop.permute.xlu0 %517
        %520 = vset.pattern.permute.xlu0 3
        %521 = vperm.xlu0 %520, %v313
        %v522 = vpop.permute.xlu0 %521
        %524 = vset.pattern.permute.xlu0 3
        %525 = vperm.xlu0 %524, %v314
        %v526 = vpop.permute.xlu0 %525
        %528 = vset.pattern.permute.xlu0 3
        %529 = vperm.xlu0 %528, %v315
        %v530 = vpop.permute.xlu0 %529
        %532 = vset.pattern.permute.xlu0 3
        %533 = vperm.xlu0 %532, %v316
        %v534 = vpop.permute.xlu0 %533
        %vm536 = vcmask 523264
        %v538 = vsel %vm536, %v496, 0
        %v541 = vsel %vm536, %v497, 0
        %v544 = vsel %vm536, %v498, 0
        %v547 = vsel %vm536, %v499, 0
        %v550 = vsel %vm536, %v500, 0
        %v553 = vsel %vm536, %v501, 0
        %v556 = vsel %vm536, %v502, 0
        %v559 = vsel %vm536, %v503, 0
        %561 = vmatpush.msra.mxu0 0.0
        %562 = vmatpush.msra.mxu0 0.0
        %563 = vmatpush.msra.mxu0 0.0
        %564 = vmatpush.msra.mxu0 0.0
        %565 = vmatpush.msra.mxu0 0.0
        %566 = vmatpush.msra.mxu0 0.0
        %567 = vmatpush.msra.mxu0 0.0
        %568 = vmatpush.msra.mxu0 0.0
        %569 = vmatpush.msra.mxu0 %v494
        %570 = vmatpush.msra.mxu0 %v492
        %571 = vmatpush.msra.mxu0 %v490
        %572 = vmatpush.msra.mxu0 %v488
        %573 = vmatpush.msra.mxu0 %v486
        %574 = vmatpush.msra.mxu0 %v484
        %575 = vmatpush.msra.mxu0 %v482
        %576 = vmatpush.msra.mxu0 %v480
        %577 = vmatmul.f32.gmra.mxu0 %v538
        %v578 = vpop.f32.mrf.mxu0
        %v579 = vadd.f32 %v506, %v578
        %580 = vmatmul.f32.gmra.mxu0 %v541
        %v581 = vpop.f32.mrf.mxu0
        %v582 = vadd.f32 %v510, %v581
        %583 = vmatmul.f32.gmra.mxu0 %v544
        %v584 = vpop.f32.mrf.mxu0
        %v585 = vadd.f32 %v514, %v584
        %586 = vmatmul.f32.gmra.mxu0 %v547
        %v587 = vpop.f32.mrf.mxu0
        %v588 = vadd.f32 %v518, %v587
        %589 = vmatmul.f32.gmra.mxu0 %v550
        %v590 = vpop.f32.mrf.mxu0
        %v591 = vadd.f32 %v522, %v590
        %592 = vmatmul.f32.gmra.mxu0 %v553
        %v593 = vpop.f32.mrf.mxu0
        %v594 = vadd.f32 %v526, %v593
        %595 = vmatmul.f32.gmra.mxu0 %v556
        %v596 = vpop.f32.mrf.mxu0
        %v597 = vadd.f32 %v530, %v596
        %598 = vmatmul.f32.gmra.mxu0 %v559
        %v599 = vpop.f32.mrf.mxu0
        %v600 = vadd.f32 %v534, %v599
        %601 = vdwg.mxu0
        %602 = vmatpush.msra.mxu0 0.0
        %603 = vmatpush.msra.mxu0 0.0
        %604 = vmatpush.msra.mxu0 0.0
        %605 = vmatpush.msra.mxu0 0.0
        %606 = vmatpush.msra.mxu0 0.0
        %607 = vmatpush.msra.mxu0 0.0
        %608 = vmatpush.msra.mxu0 0.0
        %609 = vmatpush.msra.mxu0 0.0
        %610 = vmatpush.msra.mxu0 %v495
        %611 = vmatpush.msra.mxu0 %v493
        %612 = vmatpush.msra.mxu0 %v491
        %613 = vmatpush.msra.mxu0 %v489
        %614 = vmatpush.msra.mxu0 %v487
        %615 = vmatpush.msra.mxu0 %v485
        %616 = vmatpush.msra.mxu0 %v483
        %617 = vmatpush.msra.mxu0 %v481
        %618 = vmatmul.f32.gmra.mxu0 %v538
        %v619 = vpop.f32.mrf.mxu0
        %v620 = vadd.f32 %v506, %v619
        %621 = vmatmul.f32.gmra.mxu0 %v541
        %v622 = vpop.f32.mrf.mxu0
        %v623 = vadd.f32 %v510, %v622
        %624 = vmatmul.f32.gmra.mxu0 %v544
        %v625 = vpop.f32.mrf.mxu0
        %v626 = vadd.f32 %v514, %v625
        %627 = vmatmul.f32.gmra.mxu0 %v547
        %v628 = vpop.f32.mrf.mxu0
        %v629 = vadd.f32 %v518, %v628
        %630 = vmatmul.f32.gmra.mxu0 %v550
        %v631 = vpop.f32.mrf.mxu0
        %v632 = vadd.f32 %v522, %v631
        %633 = vmatmul.f32.gmra.mxu0 %v553
        %v634 = vpop.f32.mrf.mxu0
        %v635 = vadd.f32 %v526, %v634
        %636 = vmatmul.f32.gmra.mxu0 %v556
        %v637 = vpop.f32.mrf.mxu0
        %v638 = vadd.f32 %v530, %v637
        %639 = vmatmul.f32.gmra.mxu0 %v559
        %v640 = vpop.f32.mrf.mxu0
        %v641 = vadd.f32 %v534, %v640
        %642 = vdwg.mxu0
        %v643 = vmul.f32 %v579, 0.1
        %v644 = vmul.f32 %v620, 0.1
        %v645 = vmul.f32 %v582, 0.1
        %v646 = vmul.f32 %v623, 0.1
        %v647 = vmul.f32 %v585, 0.1
        %v648 = vmul.f32 %v626, 0.1
        %v649 = vmul.f32 %v588, 0.1
        %v650 = vmul.f32 %v629, 0.1
        %v651 = vmul.f32 %v591, 0.1
        %v652 = vmul.f32 %v632, 0.1
        %v653 = vmul.f32 %v594, 0.1
        %v654 = vmul.f32 %v635, 0.1
        %v655 = vmul.f32 %v597, 0.1
        %v656 = vmul.f32 %v638, 0.1
        %v657 = vmul.f32 %v600, 0.1
        %v658 = vmul.f32 %v641, 0.1
        %v659 = vmax.f32 %v579, %v643
        %v660 = vmax.f32 %v620, %v644
        %v661 = vmax.f32 %v582, %v645
        %v662 = vmax.f32 %v623, %v646
        %v663 = vmax.f32 %v585, %v647
        %v664 = vmax.f32 %v626, %v648
        %v665 = vmax.f32 %v588, %v649
        %v666 = vmax.f32 %v629, %v650
        %v667 = vmax.f32 %v591, %v651
        %v668 = vmax.f32 %v632, %v652
        %v669 = vmax.f32 %v594, %v653
        %v670 = vmax.f32 %v635, %v654
        %v671 = vmax.f32 %v597, %v655
        %v672 = vmax.f32 %v638, %v656
        %v673 = vmax.f32 %v600, %v657
        %v674 = vmax.f32 %v641, %v658
        %v675 = vld [vmem:[%s3] sm:$0xff]
        %v676 = vld [vmem:[%s3 + $0x8] sm:$0xff]
        %v677 = vld [vmem:[%s3 + $0x10] sm:$0xff]
        %v678 = vld [vmem:[%s3 + $0x18] sm:$0xff]
        %679 = vset.pattern.permute.xlu0 4
        %680 = vperm.xlu0 %679, %v224
        %v681 = vpop.permute.xlu0 %680
        %683 = vset.pattern.permute.xlu0 4
        %684 = vperm.xlu0 %683, %v225
        %v685 = vpop.permute.xlu0 %684
        %687 = vset.pattern.permute.xlu0 4
        %688 = vperm.xlu0 %687, %v226
        %v689 = vpop.permute.xlu0 %688
        %691 = vset.pattern.permute.xlu0 4
        %692 = vperm.xlu0 %691, %v227
        %v693 = vpop.permute.xlu0 %692
        %v696 = vsel %vm536, %v675, 0
        %v699 = vsel %vm536, %v676, 0
        %v702 = vsel %vm536, %v677, 0
        %v705 = vsel %vm536, %v678, 0
        %707 = vmatpush.msra.mxu0 0.0
        %708 = vmatpush.msra.mxu0 0.0
        %709 = vmatpush.msra.mxu0 0.0
        %710 = vmatpush.msra.mxu0 0.0
        %711 = vmatpush.msra.mxu0 0.0
        %712 = vmatpush.msra.mxu0 0.0
        %713 = vmatpush.msra.mxu0 0.0
        %714 = vmatpush.msra.mxu0 0.0
        %715 = vmatpush.msra.mxu0 %v673
        %716 = vmatpush.msra.mxu0 %v671
        %717 = vmatpush.msra.mxu0 %v669
        %718 = vmatpush.msra.mxu0 %v667
        %719 = vmatpush.msra.mxu0 %v665
        %720 = vmatpush.msra.mxu0 %v663
        %721 = vmatpush.msra.mxu0 %v661
        %722 = vmatpush.msra.mxu0 %v659
        %723 = vmatmul.f32.gmra.mxu0 %v696
        %v724 = vpop.f32.mrf.mxu0
        %v725 = vadd.f32 %v681, %v724
        %726 = vmatmul.f32.gmra.mxu0 %v699
        %v727 = vpop.f32.mrf.mxu0
        %v728 = vadd.f32 %v685, %v727
        %729 = vmatmul.f32.gmra.mxu0 %v702
        %v730 = vpop.f32.mrf.mxu0
        %v731 = vadd.f32 %v689, %v730
        %732 = vmatmul.f32.gmra.mxu0 %v705
        %v733 = vpop.f32.mrf.mxu0
        %v734 = vadd.f32 %v693, %v733
        %735 = vdwg.mxu0
        %736 = vmatpush.msra.mxu0 0.0
        %737 = vmatpush.msra.mxu0 0.0
        %738 = vmatpush.msra.mxu0 0.0
        %739 = vmatpush.msra.mxu0 0.0
        %740 = vmatpush.msra.mxu0 0.0
        %741 = vmatpush.msra.mxu0 0.0
        %742 = vmatpush.msra.mxu0 0.0
        %743 = vmatpush.msra.mxu0 0.0
        %744 = vmatpush.msra.mxu0 %v674
        %745 = vmatpush.msra.mxu0 %v672
        %746 = vmatpush.msra.mxu0 %v670
        %747 = vmatpush.msra.mxu0 %v668
        %748 = vmatpush.msra.mxu0 %v666
        %749 = vmatpush.msra.mxu0 %v664
        %750 = vmatpush.msra.mxu0 %v662
        %751 = vmatpush.msra.mxu0 %v660
        %752 = vmatmul.f32.gmra.mxu0 %v696
        %v753 = vpop.f32.mrf.mxu0
        %v754 = vadd.f32 %v681, %v753
        %755 = vmatmul.f32.gmra.mxu0 %v699
        %v756 = vpop.f32.mrf.mxu0
        %v757 = vadd.f32 %v685, %v756
        %758 = vmatmul.f32.gmra.mxu0 %v702
        %v759 = vpop.f32.mrf.mxu0
        %v760 = vadd.f32 %v689, %v759
        %761 = vmatmul.f32.gmra.mxu0 %v705
        %v762 = vpop.f32.mrf.mxu0
        %v763 = vadd.f32 %v693, %v762
        %764 = vdwg.mxu0
        %v765 = vmul.f32 %v725, 0.1
        %v766 = vmul.f32 %v754, 0.1
        %v767 = vmul.f32 %v728, 0.1
        %v768 = vmul.f32 %v757, 0.1
        %v769 = vmul.f32 %v731, 0.1
        %v770 = vmul.f32 %v760, 0.1
        %v771 = vmul.f32 %v734, 0.1
        %v772 = vmul.f32 %v763, 0.1
        %v773 = vmax.f32 %v725, %v765
        %v774 = vmax.f32 %v754, %v766
        %v775 = vmax.f32 %v728, %v767
        %v776 = vmax.f32 %v757, %v768
        %v777 = vmax.f32 %v731, %v769
        %v778 = vmax.f32 %v760, %v770
        %v779 = vmax.f32 %v734, %v771
        %v780 = vmax.f32 %v763, %v772
        %v781 = vld [vmem:[%s4] sm:$0x1]
        %782 = vset.pattern.permute.xlu0 5
        %783 = vperm.xlu0 %782, %v224
        %v784 = vpop.permute.xlu0 %783
        %786 = vset.pattern.permute.xlu0 5
        %787 = vperm.xlu0 %786, %v225
        %v788 = vpop.permute.xlu0 %787
        %790 = vset.pattern.permute.xlu0 5
        %791 = vperm.xlu0 %790, %v226
        %v792 = vpop.permute.xlu0 %791
        %794 = vset.pattern.permute.xlu0 5
        %795 = vperm.xlu0 %794, %v227
        %v796 = vpop.permute.xlu0 %795
        %v798 = vmul.f32 %v784, %v773
        %v799 = vmul.f32 %v784, %v774
        %v800 = vmul.f32 %v788, %v775
        %v801 = vmul.f32 %v788, %v776
        %v802 = vmul.f32 %v792, %v777
        %v803 = vmul.f32 %v792, %v778
        %v804 = vmul.f32 %v796, %v779
        %v805 = vmul.f32 %v796, %v780
        %v806 = vadd.f32 %v798, %v800
        %v807 = vadd.f32 %v806, %v802
        %v808 = vadd.f32 %v807, %v804
        %v809 = vrot.slane %v808, 4
        %v810 = vadd.f32 %v808, %v809
        %v811 = vrot.slane %v810, 2
        %v812 = vadd.f32 %v810, %v811
        %v813 = vrot.slane %v812, 1
        %v814 = vadd.f32 %v812, %v813
        %v815 = vadd.f32 %v799, %v801
        %v816 = vadd.f32 %v815, %v803
        %v817 = vadd.f32 %v816, %v805
        %v818 = vrot.slane %v817, 4
        %v819 = vadd.f32 %v817, %v818
        %v820 = vrot.slane %v819, 2
        %v821 = vadd.f32 %v819, %v820
        %v822 = vrot.slane %v821, 1
        %v823 = vadd.f32 %v821, %v822
        %825 = vset.pattern.permute.xlu0 6
        %826 = vperm.xlu0 %825, %v781
        %v827 = vpop.permute.xlu0 %826
        %v829 = vadd.f32 %v814, %v827
        %v830 = vadd.f32 %v823, %v827
        %v833 = vrot.slane %v830, 7
        %vm834 = vcmask 1040384
        %v835 = vsel %vm834, %v829, %v833
        %v837 = vlaneseq
        %vm838 = vcmp.ge.s32.totalorder %v837, 0
        %vm839 = vcmp.lt.s32.totalorder %v837, 256
        %vm840 = vmand %vm838, %vm839
        %841 = vst.msk [vmem:[%s216] sm:$0x3] %vm840, %v835
        %s842 = sand.u32 %s137, 1
        %s843 = scalar_lea.sflag [#allocation3], %s842
        %s844 = sand.u32 %s137, 1
        %s845 = smul.addr %s844, 2
        %s846 = scalar_lea.vmem [#allocation2], %s845
        // Predicated region
        $region41: #{subnetwork_forward.1} parent=39 // pred_check
          %p847 = pneg %p147
        $region42: #{subnetwork_forward.1} parent=39 // pred_check_branch
          %849 = sbr.rel (%p847) target = $region44
        $region43: #{subnetwork_forward.1} parent=39 // pred_region
          %s850 = smul.u32 2, %s19
          %852 = vsyncadd %s843, 0
          %s853 = scalar_lea.hbm %s5, %s850
          %s855 = sshll.u32 %s846, 4
          %s856 = int_to_ptr.vmem [resolvable:$true] %s855
          %s857 = sshll.u32 %s853, 4
          %s858 = int_to_ptr.hbm [resolvable:$true] %s857
          %860 = dma.vmem_to_hbm [thread:$0]  %s856, 32, %s858, %s843
        $region44: #{subnetwork_forward.1} parent=39 // pred_fallthru
          _
      $region40: #{subnetwork_forward.1} parent=5 // pred_fallthru
        _
      %p861 = scmp.le.s32.totalorder 2, %s14
      // Predicated region
      $region45: #{subnetwork_forward.1} parent=5 // pred_check
        %p862 = pneg %p861
      $region46: #{subnetwork_forward.1} parent=5 // pred_check_branch
        %864 = sbr.rel (%p862) target = $region48
      $region47: #{subnetwork_forward.1} parent=5 // pred_region
        %s865 = ssub.s32 %s14, 2
        // Predicated region
        $region49: #{subnetwork_forward.1} parent=47 // pred_check
          %p866 = pneg %p153
        $region50: #{subnetwork_forward.1} parent=47 // pred_check_branch
          %868 = sbr.rel (%p866) target = $region52
        $region51: #{subnetwork_forward.1} parent=47 // pred_region
          %s869 = sand.u32 %s138, 1
          %s870 = scalar_lea.sflag [#allocation3], %s869
          %s871 = sand.u32 %s138, 1
          %s872 = smul.addr %s871, 2
          %s873 = scalar_lea.vmem [#allocation2], %s872
          %875 = dma.done %s870, 32
        $region52: #{subnetwork_forward.1} parent=47 // pred_fallthru
          _
      $region48: #{subnetwork_forward.1} parent=5 // pred_fallthru
        _
    $region6: #{subnetwork_forward.1} parent=1 // loop_footer
      %s18 = sadd.s32 1, %s14
    $region7: #{subnetwork_forward.1} parent=1 // loop_footer_branch
      %13 = sbr.rel target = $region3
    $region8: #{subnetwork_forward.1} parent=1 // loop_exit
      _
    %876 = vsyncpa [#allocation3], 1
    %s877 = scalar_lea.sflag [#allocation3], 1
    %878 = vsyncpa %s877, 1

</llo_original>
